<compile_context>
chip_gen: v6e
topology: v6e:2x2x1
jax: 0.10.0
libtpu: 0.0.40
codegen_flags: <defaults>
</compile_context>

<pallas_src>
import math

import jax
import jax.numpy as jnp
from jax.experimental import pallas as pl
from jax.experimental.pallas import tpu as pltpu


# ---------------------------------------------------------------------------
# Buffer setup (== VisionRotaryEmbedding.__init__, freqs_for='lang',
# custom_freqs=None, ft_seq_len=None).  Plain JAX, one-time (register_buffer).
# ---------------------------------------------------------------------------
def make_vision_rope_tables(dim, pt_seq_len, ft_seq_len=None, theta=10000.0):
    if ft_seq_len is None:
        ft_seq_len = pt_seq_len
    half = dim // 2
    freqs = 1.0 / (theta ** (jnp.arange(0, dim, 2, dtype=jnp.float32)[:half] / dim))
    t = jnp.arange(ft_seq_len, dtype=jnp.float32) / ft_seq_len * pt_seq_len
    f = t[:, None] * freqs[None, :]            # einsum('..., f -> ... f') -> (S, dim//2)
    f = jnp.repeat(f, 2, axis=-1)              # repeat '... n -> ... (n r)', r=2 -> (S, dim)
    S = ft_seq_len
    fh = jnp.broadcast_to(f[:, None, :], (S, S, dim))
    fw = jnp.broadcast_to(f[None, :, :], (S, S, dim))
    full = jnp.concatenate([fh, fw], axis=-1)  # broadcat(..., dim=-1) -> (S, S, 2*dim)
    return jnp.cos(full), jnp.sin(full)


def build_rope_tables(freqs_cos, freqs_sin, start_index, feat_dim,
                      table_dtype=jnp.float32):
    """One-time setup (like register_buffer): fold pass-through lanes + rotate_half
    sign into full-F tables.  Returns either
      ("flat",   (cosC, sinC, evenmask))  -- lane-dense roll path, or
      ("matmul", (cosF, sinS, P))         -- permutation-matmul fallback path."""
    H, W, rot_dim = freqs_cos.shape
    assert rot_dim % 2 == 0
    end_index = start_index + rot_dim
    assert 0 <= start_index and end_index <= feat_dim, "feature dim too small to rotate"
    HW = H * W

    cos = freqs_cos.reshape(HW, rot_dim).astype(jnp.float32)
    sin = freqs_sin.reshape(HW, rot_dim).astype(jnp.float32)
    k = jnp.arange(rot_dim)
    # out[2i]   = x[2i]  *cos - x[2i+1]*sin   -> even lanes: neighbour +1, sign -1
    # out[2i+1] = x[2i+1]*cos + x[2i]  *sin   -> odd  lanes: neighbour -1, sign +1
    sign = jnp.where(k % 2 == 0, -1.0, 1.0).astype(jnp.float32)

    cosF = jnp.ones((HW, feat_dim), jnp.float32).at[:, start_index:end_index].set(cos)
    sinS = jnp.zeros((HW, feat_dim), jnp.float32).at[:, start_index:end_index].set(
        sin * sign[None, :])

    q = 128 // math.gcd(feat_dim, 128)         # tokens per lane-dense row
    if HW % q == 0:
        C = feat_dim * q                       # multiple of both F and 128
        RT = HW // q
        lane_feat = jnp.arange(C) % feat_dim
        even = ((lane_feat >= start_index) & (lane_feat < end_index)
                & ((lane_feat - start_index) % 2 == 0)).astype(jnp.float32)
        return ("flat", (cosF.reshape(RT, C).astype(table_dtype),
                         sinS.reshape(RT, C).astype(table_dtype),
                         even.reshape(1, C)))

    # Fallback: exact 0/1 neighbour permutation matrix for the MXU gather.
    cols = start_index + k
    rows = jnp.where(k % 2 == 0, cols + 1, cols - 1)
    P = jnp.zeros((feat_dim, feat_dim), jnp.float32).at[rows, cols].set(1.0)
    return ("matmul", (cosF.astype(table_dtype), sinS.astype(table_dtype), P))


# ---------------------------------------------------------------------------
# Main kernel: lane-dense rolls.  out = x*cos + select(parity, roll-1, roll+1)*sin
# ---------------------------------------------------------------------------
def _rope_flat_kernel(even_ref, cos_ref, sin_ref, t_ref, o_ref):
    B = t_ref.shape[0]
    C = t_ref.shape[-1]                                   # multiple of 128
    cos = cos_ref[...].astype(jnp.float32)                # (TR, C)
    sin = sin_ref[...].astype(jnp.float32)                # (TR, C), sign folded
    use_next = even_ref[...] > 0.5                        # (1, C), resident row
    for b in range(B):                                    # tiny static unroll
        x = t_ref[b].astype(jnp.float32)                  # (TR, C)
        x_next = pltpu.roll(x, shift=C - 1, axis=1)       # x[:, c + 1]
        x_prev = pltpu.roll(x, shift=1, axis=1)           # x[:, c - 1]
        x_nbr = jnp.where(use_next, x_next, x_prev)
        o_ref[b] = (x * cos + x_nbr * sin).astype(o_ref.dtype)


def _pick_row_tile(total_rows, row_bytes, max_rows=256, vmem_budget=16 << 20):
    """Sublane-aligned row tile; full extent if small, else capped by a v7x-safe
    VMEM budget (double-buffered in/out/tables)."""
    if total_rows <= max_rows:
        return total_rows                                  # full dim is always legal
    t = min(max_rows, max(8, vmem_budget // max(row_bytes, 1)))
    return max(8, (t // 8) * 8)


@jax.jit
def _rope_forward_flat(t, cosC, sinC, evenmask):
    B, H, W, F = t.shape
    RT, C = cosC.shape
    assert H * W * F == RT * C and sinC.shape == (RT, C) and evenmask.shape == (1, C)
    t3 = t.reshape(B, RT, C)                               # free, contiguous reshape

    row_bytes = 2 * (2 * B * C * t.dtype.itemsize + 2 * C * cosC.dtype.itemsize)
    TR = _pick_row_tile(RT, row_bytes)

    bytes_accessed = (2 * B * RT * C * t.dtype.itemsize
                      + 2 * RT * C * cosC.dtype.itemsize + 4 * C)
    out = pl.pallas_call(
        _rope_flat_kernel,
        out_shape=jax.ShapeDtypeStruct((B, RT, C), t.dtype),
        grid_spec=pl.GridSpec(
            grid=(pl.cdiv(RT, TR),),
            in_specs=[
                pl.BlockSpec((1, C), lambda r: (0, 0)),          # parity row (resident)
                pl.BlockSpec((TR, C), lambda r: (r, 0)),         # cos tile
                pl.BlockSpec((TR, C), lambda r: (r, 0)),         # sin tile
                pl.BlockSpec((B, TR, C), lambda r: (0, r, 0)),   # t (batch folded in)
            ],
            out_specs=pl.BlockSpec((B, TR, C), lambda r: (0, r, 0)),
        ),
        compiler_params=pltpu.CompilerParams(dimension_semantics=("parallel",)),
        cost_estimate=pl.CostEstimate(flops=6 * B * RT * C, transcendentals=0,
                                      bytes_accessed=bytes_accessed),
    )(evenmask, cosC, sinC, t3)
    return out.reshape(B, H, W, F)


# ---------------------------------------------------------------------------
# Fallback kernel (H*W not a multiple of 128//gcd(F,128)):  out = x*cos + (x@P)*sin
# ---------------------------------------------------------------------------
def _rope_matmul_kernel(p_ref, cos_ref, sin_ref, t_ref, o_ref):
    x = t_ref[...]                                         # (T, F) in HBM dtype
    if x.dtype == jnp.bfloat16:
        # Exact: P is 0/1, so bf16 MXU selection is lossless; restores bf16 MXU speed.
        nbr = jnp.dot(x, p_ref[...].astype(jnp.bfloat16),
                      preferred_element_type=jnp.float32)
    else:
        nbr = jnp.dot(x.astype(jnp.float32), p_ref[...],
                      preferred_element_type=jnp.float32)
    xf = x.astype(jnp.float32)
    o_ref[...] = (xf * cos_ref[...].astype(jnp.float32)
                  + nbr * sin_ref[...].astype(jnp.float32)).astype(o_ref.dtype)


@jax.jit
def _rope_forward_matmul(t, cosF, sinS, P):
    B, H, W, F = t.shape
    HW = H * W
    T = HW if HW <= 512 else 512                           # full dim or multiple of 8
    t3 = t.reshape(B, HW, F)
    bytes_accessed = (2 * B * HW * F * t.dtype.itemsize
                      + 2 * HW * F * cosF.dtype.itemsize + F * F * 4)
    out = pl.pallas_call(
        _rope_matmul_kernel,
        out_shape=jax.ShapeDtypeStruct((B, HW, F), t.dtype),
        grid_spec=pl.GridSpec(
            # batch innermost: table/P block indices constant across consecutive steps.
            grid=(pl.cdiv(HW, T), B),
            in_specs=[
                pl.BlockSpec((F, F), lambda r, b: (0, 0)),            # P (resident)
                pl.BlockSpec((T, F), lambda r, b: (r, 0)),            # cos tile
                pl.BlockSpec((T, F), lambda r, b: (r, 0)),            # sin tile
                pl.BlockSpec((None, T, F), lambda r, b: (b, r, 0)),   # t (batch squeezed)
            ],
            out_specs=pl.BlockSpec((None, T, F), lambda r, b: (b, r, 0)),
        ),
        compiler_params=pltpu.CompilerParams(
            dimension_semantics=("parallel", "arbitrary")),
        cost_estimate=pl.CostEstimate(flops=2 * B * HW * F * F + 4 * B * HW * F,
                                      transcendentals=0, bytes_accessed=bytes_accessed),
    )(P, cosF, sinS, t3)
    return out.reshape(B, H, W, F)


def vision_rope_forward(t, tables):
    """== VisionRotaryEmbedding.forward: single fused HBM pass."""
    kind, arrs = tables
    if kind == "flat":
        return _rope_forward_flat(t, *arrs)
    return _rope_forward_matmul(t, *arrs)


# ---------------------------------------------------------------------------
# Pure-JAX reference (mirrors the PyTorch module) for correctness checking.
# ---------------------------------------------------------------------------
def _rotate_half_ref(x):
    xr = x.reshape(*x.shape[:-1], x.shape[-1] // 2, 2)
    x1, x2 = xr[..., 0], xr[..., 1]
    return jnp.stack((-x2, x1), axis=-1).reshape(x.shape)


def vision_rope_ref(t, freqs_cos, freqs_sin, start_index=0):
    rot_dim = freqs_cos.shape[-1]
    end_index = start_index + rot_dim
    tl = t[..., :start_index]
    tm = t[..., start_index:end_index]
    tr = t[..., end_index:]
    tm = tm * freqs_cos + _rotate_half_ref(tm) * freqs_sin
    return jnp.concatenate([tl, tm, tr], axis=-1)


if __name__ == "__main__":
    # Module-consistent small shapes: dim=64 per spatial axis -> rot_dim = 128.
    dim, pt_seq_len = 64, 8            # 8x8 spatial grid
    B, F, start_index = 2, 160, 16     # 16 pass-through + 128 rotated + 16 pass-through

    freqs_cos, freqs_sin = make_vision_rope_tables(dim, pt_seq_len)
    key = jax.random.PRNGKey(0)
    k0, k1 = jax.random.split(key)
    t = jax.random.normal(k0, (B, pt_seq_len, pt_seq_len, F), dtype=jnp.float32)

    # --- main lane-dense roll path, f32 activations + f32 tables (exact) ---
    tabs_f32 = build_rope_tables(freqs_cos, freqs_sin, start_index, F, jnp.float32)
    assert tabs_f32[0] == "flat"
    out = jax.block_until_ready(vision_rope_forward(t, tabs_f32))
    ref = vision_rope_ref(t, freqs_cos, freqs_sin, start_index=start_index)
    assert out.shape == t.shape and out.dtype == t.dtype
    assert jnp.allclose(out, ref, atol=1e-5, rtol=1e-5), "f32 mismatch vs reference"

    # --- bf16 activations + bf16 tables: HBM stays bf16, compute f32 in vregs ---
    tabs_bf16 = build_rope_tables(freqs_cos, freqs_sin, start_index, F, jnp.bfloat16)
    t_bf16 = t.astype(jnp.bfloat16)
    out_bf16 = jax.block_until_ready(vision_rope_forward(t_bf16, tabs_bf16))
    ref_bf16 = vision_rope_ref(t_bf16.astype(jnp.float32), freqs_cos, freqs_sin,
                               start_index=start_index)
    assert out_bf16.dtype == jnp.bfloat16
    assert jnp.allclose(out_bf16.astype(jnp.float32), ref_bf16,
                        atol=7.5e-2, rtol=5e-2), "bf16 mismatch vs reference"

    # --- fallback path: 7x7 grid -> H*W = 49, not a multiple of 128//gcd(160,128)=4 ---
    fc7, fs7 = make_vision_rope_tables(dim, 7)
    tabs7 = build_rope_tables(fc7, fs7, start_index, F, jnp.float32)
    assert tabs7[0] == "matmul"
    t7 = jax.random.normal(k1, (1, 7, 7, F), dtype=jnp.float32)
    out7 = jax.block_until_ready(vision_rope_forward(t7, tabs7))
    ref7 = vision_rope_ref(t7, fc7, fs7, start_index=start_index)
    assert jnp.allclose(out7, ref7, atol=1e-5, rtol=1e-5), "fallback mismatch vs reference"

    print("KERNEL_OK")
</pallas_src>

<mosaic_0001>
module attributes {stable_mosaic.version = 11 : i64} {
  func.func @_rope_flat_kernel(%arg0: i32, %arg1: memref<1x640xf32, #tpu.memory_space<vmem>>, %arg2: memref<16x640xf32, #tpu.memory_space<vmem>>, %arg3: memref<16x640xf32, #tpu.memory_space<vmem>>, %arg4: memref<2x16x640xf32, #tpu.memory_space<vmem>>, %arg5: memref<2x16x640xf32, #tpu.memory_space<vmem>>) attributes {dimension_semantics = [#tpu.dimension_semantics<parallel>], iteration_bounds = array<i64: 1>, scalar_prefetch = 0 : i64, scratch_operands = 0 : i64, tpu.core_type = #tpu.core_type<tc>, window_params = [{pipeline_mode = #tpu.pipeline_mode<synchronous>, transform_indices = @transform_0, window_bounds = array<i64: 1, 640>}, {transform_indices = @transform_1, window_bounds = array<i64: 16, 640>}, {transform_indices = @transform_2, window_bounds = array<i64: 16, 640>}, {transform_indices = @transform_3, window_bounds = array<i64: 2, 16, 640>}, {transform_indices = @transform_4, window_bounds = array<i64: 2, 16, 640>}]} {
    %c0 = arith.constant 0 : index
    %c0_0 = arith.constant 0 : index
    %0 = vector.load %arg2[%c0, %c0_0] : memref<16x640xf32, #tpu.memory_space<vmem>>, vector<16x640xf32>
    %c0_1 = arith.constant 0 : index
    %c0_2 = arith.constant 0 : index
    %1 = vector.load %arg3[%c0_1, %c0_2] : memref<16x640xf32, #tpu.memory_space<vmem>>, vector<16x640xf32>
    %c0_3 = arith.constant 0 : index
    %c0_4 = arith.constant 0 : index
    %2 = vector.load %arg1[%c0_3, %c0_4] : memref<1x640xf32, #tpu.memory_space<vmem>>, vector<1x640xf32>
    %cst = arith.constant 5.000000e-01 : f32
    %3 = vector.broadcast %cst : f32 to vector<1x640xf32>
    %4 = arith.cmpf ogt, %2, %3 : vector<1x640xf32>
    %c0_5 = arith.constant 0 : index
    %c0_6 = arith.constant 0 : index
    %c0_7 = arith.constant 0 : index
    %5 = vector.load %arg4[%c0_5, %c0_6, %c0_7] : memref<2x16x640xf32, #tpu.memory_space<vmem>>, vector<1x16x640xf32>
    %6 = vector.shape_cast %5 : vector<1x16x640xf32> to vector<16x640xf32>
    %c639_i32 = arith.constant 639 : i32
    %7 = tpu.dynamic_rotate %6 by %c639_i32 dim 1 : vector<16x640xf32>, i32 -> vector<16x640xf32>
    %c1_i32 = arith.constant 1 : i32
    %8 = tpu.dynamic_rotate %6 by %c1_i32 dim 1 : vector<16x640xf32>, i32 -> vector<16x640xf32>
    %9 = vector.shape_cast %4 : vector<1x640xi1> to vector<1x640xi1>
    %10 = vector.broadcast %9 : vector<1x640xi1> to vector<16x640xi1>
    %11 = arith.select %10, %7, %8 : vector<16x640xi1>, vector<16x640xf32>
    %12 = arith.mulf %6, %0 : vector<16x640xf32>
    %13 = arith.mulf %11, %1 : vector<16x640xf32>
    %14 = arith.addf %12, %13 : vector<16x640xf32>
    %c0_8 = arith.constant 0 : index
    %c0_9 = arith.constant 0 : index
    %c0_10 = arith.constant 0 : index
    %15 = vector.load %arg5[%c0_8, %c0_9, %c0_10] : memref<2x16x640xf32, #tpu.memory_space<vmem>>, vector<1x16x640xf32>
    %16 = vector.shape_cast %15 : vector<1x16x640xf32> to vector<16x640xf32>
    %17 = vector.shape_cast %14 : vector<16x640xf32> to vector<1x16x640xf32>
    tpu.vector_store %arg5[%c0_8, %c0_9, %c0_10], %17 {strides = array<i32>} : memref<2x16x640xf32, #tpu.memory_space<vmem>>, vector<1x16x640xf32>,
    %c1 = arith.constant 1 : index
    %c0_11 = arith.constant 0 : index
    %c0_12 = arith.constant 0 : index
    %18 = vector.load %arg4[%c1, %c0_11, %c0_12] : memref<2x16x640xf32, #tpu.memory_space<vmem>>, vector<1x16x640xf32>
    %19 = vector.shape_cast %18 : vector<1x16x640xf32> to vector<16x640xf32>
    %c639_i32_13 = arith.constant 639 : i32
    %20 = tpu.dynamic_rotate %19 by %c639_i32_13 dim 1 : vector<16x640xf32>, i32 -> vector<16x640xf32>
    %c1_i32_14 = arith.constant 1 : i32
    %21 = tpu.dynamic_rotate %19 by %c1_i32_14 dim 1 : vector<16x640xf32>, i32 -> vector<16x640xf32>
    %22 = vector.shape_cast %4 : vector<1x640xi1> to vector<1x640xi1>
    %23 = vector.broadcast %22 : vector<1x640xi1> to vector<16x640xi1>
    %24 = arith.select %23, %20, %21 : vector<16x640xi1>, vector<16x640xf32>
    %25 = arith.mulf %19, %0 : vector<16x640xf32>
    %26 = arith.mulf %24, %1 : vector<16x640xf32>
    %27 = arith.addf %25, %26 : vector<16x640xf32>
    %c1_15 = arith.constant 1 : index
    %c0_16 = arith.constant 0 : index
    %c0_17 = arith.constant 0 : index
    %28 = vector.load %arg5[%c1_15, %c0_16, %c0_17] : memref<2x16x640xf32, #tpu.memory_space<vmem>>, vector<1x16x640xf32>
    %29 = vector.shape_cast %28 : vector<1x16x640xf32> to vector<16x640xf32>
    %30 = vector.shape_cast %27 : vector<16x640xf32> to vector<1x16x640xf32>
    tpu.vector_store %arg5[%c1_15, %c0_16, %c0_17], %30 {strides = array<i32>} : memref<2x16x640xf32, #tpu.memory_space<vmem>>, vector<1x16x640xf32>,
    return
  }
  func.func @transform_0(%arg0: i32) -> (i32, i32) {
    %c0_i32 = arith.constant 0 : i32
    %c0_i32_0 = arith.constant 0 : i32
    %c0_i32_1 = arith.constant 0 : i32
    return %c0_i32, %c0_i32_0 : i32, i32
  }
  func.func @transform_1(%arg0: i32) -> (i32, i32) {
    %c0_i32 = arith.constant 0 : i32
    %c0_i32_0 = arith.constant 0 : i32
    return %arg0, %c0_i32 : i32, i32
  }
  func.func @transform_2(%arg0: i32) -> (i32, i32) {
    %c0_i32 = arith.constant 0 : i32
    %c0_i32_0 = arith.constant 0 : i32
    return %arg0, %c0_i32 : i32, i32
  }
  func.func @transform_3(%arg0: i32) -> (i32, i32, i32) {
    %c0_i32 = arith.constant 0 : i32
    %c0_i32_0 = arith.constant 0 : i32
    %c0_i32_1 = arith.constant 0 : i32
    return %c0_i32, %arg0, %c0_i32_0 : i32, i32, i32
  }
  func.func @transform_4(%arg0: i32) -> (i32, i32, i32) {
    %c0_i32 = arith.constant 0 : i32
    %c0_i32_0 = arith.constant 0 : i32
    %c0_i32_1 = arith.constant 0 : i32
    return %c0_i32, %arg0, %c0_i32_0 : i32, i32, i32
  }
}

</mosaic_0001>

<llo_original>
// kernel: _rope_forward_flat.1
$region0: #{_rope_forward_flat.1}
  #allocation0 [shape = 'u32[]', space=smem, size = 0x4, offset = 0x4, fixed_abs, tag = 'smem constant byte address 0x4 - core index']
  #allocation1 [shape = 'u32[144,128]{1,0:T(1,128)}', space=vmem, size = 0x12000, scoped, tag = 'internal scratch']
  %s0 = inlined_call_operand.vmem [shape: f32[1,640], index: 0, kind: input, shape index: {}]
  %s1 = inlined_call_operand.vmem [shape: f32[16,640], index: 1, kind: input, shape index: {}]
  %s2 = inlined_call_operand.vmem [shape: f32[16,640], index: 2, kind: input, shape index: {}]
  %s3 = inlined_call_operand.vmem [shape: f32[2,16,640], index: 3, kind: input, shape index: {}]
  %s4 = inlined_call_operand.vmem [shape: f32[2,16,640], index: 4, kind: output, shape index: {}]
  %s5 = sld [smem:[#allocation0]]
  $region26: #{_rope_forward_flat.1} parent=0
    _
  %s7 = ssub.s32 1, %s5
  %s8 = scalar_select 0, %s7, %s5
  // Predicated region
  $region2: #{_rope_forward_flat.1} parent=0 // pred_check
    _
  $region3: #{_rope_forward_flat.1} parent=0 // pred_check_branch
    %10 = sbr.rel (0) target = $region5
  $region4: #{_rope_forward_flat.1} parent=0 // pred_region
    _
  $region5: #{_rope_forward_flat.1} parent=0 // pred_fallthru
    _
  // Predicated region
  $region6: #{_rope_forward_flat.1} parent=0 // pred_check
    _
  $region7: #{_rope_forward_flat.1} parent=0 // pred_check_branch
    %12 = sbr.rel (0) target = $region9
  $region8: #{_rope_forward_flat.1} parent=0 // pred_region
    _
  $region9: #{_rope_forward_flat.1} parent=0 // pred_fallthru
    _
  // Predicated region
  $region10: #{_rope_forward_flat.1} parent=0 // pred_check
    _
  $region11: #{_rope_forward_flat.1} parent=0 // pred_check_branch
    %14 = sbr.rel (0) target = $region13
  $region12: #{_rope_forward_flat.1} parent=0 // pred_region
    _
  $region13: #{_rope_forward_flat.1} parent=0 // pred_fallthru
    _
  // Predicated region
  $region14: #{_rope_forward_flat.1} parent=0 // pred_check
    _
  $region15: #{_rope_forward_flat.1} parent=0 // pred_check_branch
    %16 = sbr.rel (0) target = $region17
  $region16: #{_rope_forward_flat.1} parent=0 // pred_region
    _
  $region17: #{_rope_forward_flat.1} parent=0 // pred_fallthru
    _
  %v17 = vld [vmem:[%s1] sm:$0xff]
  %v18 = vld [vmem:[%s1 + $0x8] sm:$0xff]
  %v19 = vld [vmem:[%s1 + $0x10] sm:$0xff]
  %v20 = vld [vmem:[%s1 + $0x18] sm:$0xff]
  %v21 = vld [vmem:[%s1 + $0x20] sm:$0xff]
  %v22 = vld [vmem:[%s1 + $0x28] sm:$0xff]
  %v23 = vld [vmem:[%s1 + $0x30] sm:$0xff]
  %v24 = vld [vmem:[%s1 + $0x38] sm:$0xff]
  %v25 = vld [vmem:[%s1 + $0x40] sm:$0xff]
  %v26 = vld [vmem:[%s1 + $0x48] sm:$0xff]
  %v27 = vld [vmem:[%s2] sm:$0xff]
  %v28 = vld [vmem:[%s2 + $0x8] sm:$0xff]
  %v29 = vld [vmem:[%s2 + $0x10] sm:$0xff]
  %v30 = vld [vmem:[%s2 + $0x18] sm:$0xff]
  %v31 = vld [vmem:[%s2 + $0x20] sm:$0xff]
  %v32 = vld [vmem:[%s2 + $0x28] sm:$0xff]
  %v33 = vld [vmem:[%s2 + $0x30] sm:$0xff]
  %v34 = vld [vmem:[%s2 + $0x38] sm:$0xff]
  %v35 = vld [vmem:[%s2 + $0x40] sm:$0xff]
  %v36 = vld [vmem:[%s2 + $0x48] sm:$0xff]
  %v37 = vld [vmem:[%s0] sm:$0x1f]
  %vm38 = vcmp.gt.f32.partialorder %v37, 0.5
  %v39 = vld [vmem:[%s3] sm:$0xff]
  %v40 = vld [vmem:[%s3 + $0x8] sm:$0xff]
  %v41 = vld [vmem:[%s3 + $0x10] sm:$0xff]
  %v42 = vld [vmem:[%s3 + $0x18] sm:$0xff]
  %v43 = vld [vmem:[%s3 + $0x20] sm:$0xff]
  %v44 = vld [vmem:[%s3 + $0x28] sm:$0xff]
  %v45 = vld [vmem:[%s3 + $0x30] sm:$0xff]
  %v46 = vld [vmem:[%s3 + $0x38] sm:$0xff]
  %v47 = vld [vmem:[%s3 + $0x40] sm:$0xff]
  %v48 = vld [vmem:[%s3 + $0x48] sm:$0xff]
  %49 = vrot.lane.b32.xlu0 %v39, 127
  %v50 = vpop.permute.xlu0 %49
  %51 = vrot.lane.b32.xlu0 %v44, 127
  %v52 = vpop.permute.xlu0 %51
  %53 = vrot.lane.b32.xlu0 %v40, 127
  %v54 = vpop.permute.xlu0 %53
  %55 = vrot.lane.b32.xlu0 %v45, 127
  %v56 = vpop.permute.xlu0 %55
  %57 = vrot.lane.b32.xlu0 %v41, 127
  %v58 = vpop.permute.xlu0 %57
  %59 = vrot.lane.b32.xlu0 %v46, 127
  %v60 = vpop.permute.xlu0 %59
  %61 = vrot.lane.b32.xlu0 %v42, 127
  %v62 = vpop.permute.xlu0 %61
  %63 = vrot.lane.b32.xlu0 %v47, 127
  %v64 = vpop.permute.xlu0 %63
  %65 = vrot.lane.b32.xlu0 %v43, 127
  %v66 = vpop.permute.xlu0 %65
  %67 = vrot.lane.b32.xlu0 %v48, 127
  %v68 = vpop.permute.xlu0 %67
  %v69 = vlaneseq
  %v70 = vand.u32 %v69, 127
  %vm71 = vcmp.lt.s32.totalorder %v70, 127
  %v72 = vsel %vm71, %v62, %v66
  %v73 = vsel %vm71, %v64, %v68
  %v74 = vsel %vm71, %v58, %v62
  %v75 = vsel %vm71, %v60, %v64
  %v76 = vsel %vm71, %v54, %v58
  %v77 = vsel %vm71, %v56, %v60
  %v78 = vsel %vm71, %v50, %v54
  %v79 = vsel %vm71, %v52, %v56
  %v80 = vsel %vm71, %v66, %v50
  %v81 = vsel %vm71, %v68, %v52
  %82 = vrot.lane.b32.xlu0 %v39, 1
  %v83 = vpop.permute.xlu0 %82
  %84 = vrot.lane.b32.xlu0 %v44, 1
  %v85 = vpop.permute.xlu0 %84
  %86 = vrot.lane.b32.xlu0 %v40, 1
  %v87 = vpop.permute.xlu0 %86
  %88 = vrot.lane.b32.xlu0 %v45, 1
  %v89 = vpop.permute.xlu0 %88
  %90 = vrot.lane.b32.xlu0 %v41, 1
  %v91 = vpop.permute.xlu0 %90
  %92 = vrot.lane.b32.xlu0 %v46, 1
  %v93 = vpop.permute.xlu0 %92
  %94 = vrot.lane.b32.xlu0 %v42, 1
  %v95 = vpop.permute.xlu0 %94
  %96 = vrot.lane.b32.xlu0 %v47, 1
  %v97 = vpop.permute.xlu0 %96
  %98 = vrot.lane.b32.xlu0 %v43, 1
  %v99 = vpop.permute.xlu0 %98
  %100 = vrot.lane.b32.xlu0 %v48, 1
  %v101 = vpop.permute.xlu0 %100
  %vm102 = vcmp.lt.s32.totalorder %v70, 1
  %v103 = vsel %vm102, %v95, %v99
  %v104 = vsel %vm102, %v97, %v101
  %v105 = vsel %vm102, %v91, %v95
  %v106 = vsel %vm102, %v93, %v97
  %v107 = vsel %vm102, %v87, %v91
  %v108 = vsel %vm102, %v89, %v93
  %v109 = vsel %vm102, %v83, %v87
  %v110 = vsel %vm102, %v85, %v89
  %v111 = vsel %vm102, %v99, %v83
  %v112 = vsel %vm102, %v101, %v85
  %v113 = vsel %vm38, 1, 0
  %v114 = vlaneseq
  %v115 = vshrl.u32 %v114, 7
  %v116 = vsub.s32 0, %v115
  %v117 = vrot.slane %v113, %v116
  %v118 = vlaneseq
  %v119 = vshrl.u32 %v118, 7
  %v120 = vsub.s32 1, %v119
  %v121 = vrot.slane %v113, %v120
  %v122 = vlaneseq
  %v123 = vshrl.u32 %v122, 7
  %v124 = vsub.s32 2, %v123
  %v125 = vrot.slane %v113, %v124
  %v126 = vlaneseq
  %v127 = vshrl.u32 %v126, 7
  %v128 = vsub.s32 3, %v127
  %v129 = vrot.slane %v113, %v128
  %v130 = vlaneseq
  %v131 = vshrl.u32 %v130, 7
  %v132 = vsub.s32 4, %v131
  %v133 = vrot.slane %v113, %v132
  %vm134 = vcmp.eq.s32.totalorder %v117, 1
  %vm135 = vcmp.eq.s32.totalorder %v121, 1
  %vm136 = vcmp.eq.s32.totalorder %v125, 1
  %vm137 = vcmp.eq.s32.totalorder %v129, 1
  %vm138 = vcmp.eq.s32.totalorder %v133, 1
  %v139 = vsel %vm134, %v78, %v111
  %v140 = vsel %vm135, %v76, %v109
  %v141 = vsel %vm136, %v74, %v107
  %v142 = vsel %vm137, %v72, %v105
  %v143 = vsel %vm138, %v80, %v103
  %v144 = vsel %vm134, %v79, %v112
  %v145 = vsel %vm135, %v77, %v110
  %v146 = vsel %vm136, %v75, %v108
  %v147 = vsel %vm137, %v73, %v106
  %v148 = vsel %vm138, %v81, %v104
  %v149 = vmul.f32 %v39, %v17
  %v150 = vmul.f32 %v40, %v18
  %v151 = vmul.f32 %v41, %v19
  %v152 = vmul.f32 %v42, %v20
  %v153 = vmul.f32 %v43, %v21
  %v154 = vmul.f32 %v44, %v22
  %v155 = vmul.f32 %v45, %v23
  %v156 = vmul.f32 %v46, %v24
  %v157 = vmul.f32 %v47, %v25
  %v158 = vmul.f32 %v48, %v26
  %v159 = vmul.f32 %v139, %v27
  %v160 = vmul.f32 %v140, %v28
  %v161 = vmul.f32 %v141, %v29
  %v162 = vmul.f32 %v142, %v30
  %v163 = vmul.f32 %v143, %v31
  %v164 = vmul.f32 %v144, %v32
  %v165 = vmul.f32 %v145, %v33
  %v166 = vmul.f32 %v146, %v34
  %v167 = vmul.f32 %v147, %v35
  %v168 = vmul.f32 %v148, %v36
  %v169 = vadd.f32 %v149, %v159
  %v170 = vadd.f32 %v150, %v160
  %v171 = vadd.f32 %v151, %v161
  %v172 = vadd.f32 %v152, %v162
  %v173 = vadd.f32 %v153, %v163
  %v174 = vadd.f32 %v154, %v164
  %v175 = vadd.f32 %v155, %v165
  %v176 = vadd.f32 %v156, %v166
  %v177 = vadd.f32 %v157, %v167
  %v178 = vadd.f32 %v158, %v168
  %179 = vst [vmem:[%s4] sm:$0xff] %v169
  %180 = vst [vmem:[%s4 + $0x8] sm:$0xff] %v170
  %181 = vst [vmem:[%s4 + $0x10] sm:$0xff] %v171
  %182 = vst [vmem:[%s4 + $0x18] sm:$0xff] %v172
  %183 = vst [vmem:[%s4 + $0x20] sm:$0xff] %v173
  %184 = vst [vmem:[%s4 + $0x28] sm:$0xff] %v174
  %185 = vst [vmem:[%s4 + $0x30] sm:$0xff] %v175
  %186 = vst [vmem:[%s4 + $0x38] sm:$0xff] %v176
  %187 = vst [vmem:[%s4 + $0x40] sm:$0xff] %v177
  %188 = vst [vmem:[%s4 + $0x48] sm:$0xff] %v178
  %s189 = scalar_lea.vmem %s3, 80
  %v190 = vld [vmem:[%s189] sm:$0xff]
  %v191 = vld [vmem:[%s189 + $0x8] sm:$0xff]
  %v192 = vld [vmem:[%s189 + $0x10] sm:$0xff]
  %v193 = vld [vmem:[%s189 + $0x18] sm:$0xff]
  %v194 = vld [vmem:[%s189 + $0x20] sm:$0xff]
  %v195 = vld [vmem:[%s189 + $0x28] sm:$0xff]
  %v196 = vld [vmem:[%s189 + $0x30] sm:$0xff]
  %v197 = vld [vmem:[%s189 + $0x38] sm:$0xff]
  %v198 = vld [vmem:[%s189 + $0x40] sm:$0xff]
  %v199 = vld [vmem:[%s189 + $0x48] sm:$0xff]
  %200 = vrot.lane.b32.xlu0 %v190, 127
  %v201 = vpop.permute.xlu0 %200
  %202 = vrot.lane.b32.xlu0 %v195, 127
  %v203 = vpop.permute.xlu0 %202
  %204 = vrot.lane.b32.xlu0 %v191, 127
  %v205 = vpop.permute.xlu0 %204
  %206 = vrot.lane.b32.xlu0 %v196, 127
  %v207 = vpop.permute.xlu0 %206
  %208 = vrot.lane.b32.xlu0 %v192, 127
  %v209 = vpop.permute.xlu0 %208
  %210 = vrot.lane.b32.xlu0 %v197, 127
  %v211 = vpop.permute.xlu0 %210
  %212 = vrot.lane.b32.xlu0 %v193, 127
  %v213 = vpop.permute.xlu0 %212
  %214 = vrot.lane.b32.xlu0 %v198, 127
  %v215 = vpop.permute.xlu0 %214
  %216 = vrot.lane.b32.xlu0 %v194, 127
  %v217 = vpop.permute.xlu0 %216
  %218 = vrot.lane.b32.xlu0 %v199, 127
  %v219 = vpop.permute.xlu0 %218
  %v220 = vsel %vm71, %v213, %v217
  %v221 = vsel %vm71, %v215, %v219
  %v222 = vsel %vm71, %v209, %v213
  %v223 = vsel %vm71, %v211, %v215
  %v224 = vsel %vm71, %v205, %v209
  %v225 = vsel %vm71, %v207, %v211
  %v226 = vsel %vm71, %v201, %v205
  %v227 = vsel %vm71, %v203, %v207
  %v228 = vsel %vm71, %v217, %v201
  %v229 = vsel %vm71, %v219, %v203
  %230 = vrot.lane.b32.xlu0 %v190, 1
  %v231 = vpop.permute.xlu0 %230
  %232 = vrot.lane.b32.xlu0 %v195, 1
  %v233 = vpop.permute.xlu0 %232
  %234 = vrot.lane.b32.xlu0 %v191, 1
  %v235 = vpop.permute.xlu0 %234
  %236 = vrot.lane.b32.xlu0 %v196, 1
  %v237 = vpop.permute.xlu0 %236
  %238 = vrot.lane.b32.xlu0 %v192, 1
  %v239 = vpop.permute.xlu0 %238
  %240 = vrot.lane.b32.xlu0 %v197, 1
  %v241 = vpop.permute.xlu0 %240
  %242 = vrot.lane.b32.xlu0 %v193, 1
  %v243 = vpop.permute.xlu0 %242
  %244 = vrot.lane.b32.xlu0 %v198, 1
  %v245 = vpop.permute.xlu0 %244
  %246 = vrot.lane.b32.xlu0 %v194, 1
  %v247 = vpop.permute.xlu0 %246
  %248 = vrot.lane.b32.xlu0 %v199, 1
  %v249 = vpop.permute.xlu0 %248
  %v250 = vsel %vm102, %v243, %v247
  %v251 = vsel %vm102, %v245, %v249
  %v252 = vsel %vm102, %v239, %v243
  %v253 = vsel %vm102, %v241, %v245
  %v254 = vsel %vm102, %v235, %v239
  %v255 = vsel %vm102, %v237, %v241
  %v256 = vsel %vm102, %v231, %v235
  %v257 = vsel %vm102, %v233, %v237
  %v258 = vsel %vm102, %v247, %v231
  %v259 = vsel %vm102, %v249, %v233
  %v260 = vsel %vm134, %v226, %v258
  %v261 = vsel %vm135, %v224, %v256
  %v262 = vsel %vm136, %v222, %v254
  %v263 = vsel %vm137, %v220, %v252
  %v264 = vsel %vm138, %v228, %v250
  %v265 = vsel %vm134, %v227, %v259
  %v266 = vsel %vm135, %v225, %v257
  %v267 = vsel %vm136, %v223, %v255
  %v268 = vsel %vm137, %v221, %v253
  %v269 = vsel %vm138, %v229, %v251
  %v270 = vmul.f32 %v190, %v17
  %v271 = vmul.f32 %v191, %v18
  %v272 = vmul.f32 %v192, %v19
  %v273 = vmul.f32 %v193, %v20
  %v274 = vmul.f32 %v194, %v21
  %v275 = vmul.f32 %v195, %v22
  %v276 = vmul.f32 %v196, %v23
  %v277 = vmul.f32 %v197, %v24
  %v278 = vmul.f32 %v198, %v25
  %v279 = vmul.f32 %v199, %v26
  %v280 = vmul.f32 %v260, %v27
  %v281 = vmul.f32 %v261, %v28
  %v282 = vmul.f32 %v262, %v29
  %v283 = vmul.f32 %v263, %v30
  %v284 = vmul.f32 %v264, %v31
  %v285 = vmul.f32 %v265, %v32
  %v286 = vmul.f32 %v266, %v33
  %v287 = vmul.f32 %v267, %v34
  %v288 = vmul.f32 %v268, %v35
  %v289 = vmul.f32 %v269, %v36
  %v290 = vadd.f32 %v270, %v280
  %v291 = vadd.f32 %v271, %v281
  %v292 = vadd.f32 %v272, %v282
  %v293 = vadd.f32 %v273, %v283
  %v294 = vadd.f32 %v274, %v284
  %v295 = vadd.f32 %v275, %v285
  %v296 = vadd.f32 %v276, %v286
  %v297 = vadd.f32 %v277, %v287
  %v298 = vadd.f32 %v278, %v288
  %v299 = vadd.f32 %v279, %v289
  %s300 = scalar_lea.vmem %s4, 80
  %301 = vst [vmem:[%s300] sm:$0xff] %v290
  %302 = vst [vmem:[%s300 + $0x8] sm:$0xff] %v291
  %303 = vst [vmem:[%s300 + $0x10] sm:$0xff] %v292
  %304 = vst [vmem:[%s300 + $0x18] sm:$0xff] %v293
  %305 = vst [vmem:[%s300 + $0x20] sm:$0xff] %v294
  %306 = vst [vmem:[%s300 + $0x28] sm:$0xff] %v295
  %307 = vst [vmem:[%s300 + $0x30] sm:$0xff] %v296
  %308 = vst [vmem:[%s300 + $0x38] sm:$0xff] %v297
  %309 = vst [vmem:[%s300 + $0x40] sm:$0xff] %v298
  %310 = vst [vmem:[%s300 + $0x48] sm:$0xff] %v299
  // Predicated region
  $region18: #{_rope_forward_flat.1} parent=0 // pred_check
    _
  $region19: #{_rope_forward_flat.1} parent=0 // pred_check_branch
    %312 = sbr.rel (0) target = $region21
  $region20: #{_rope_forward_flat.1} parent=0 // pred_region
    _
  $region21: #{_rope_forward_flat.1} parent=0 // pred_fallthru
    _
  // Predicated region
  $region22: #{_rope_forward_flat.1} parent=0 // pred_check
    _
  $region23: #{_rope_forward_flat.1} parent=0 // pred_check_branch
    %314 = sbr.rel (0) target = $region25
  $region24: #{_rope_forward_flat.1} parent=0 // pred_region
    _
  $region25: #{_rope_forward_flat.1} parent=0 // pred_fallthru
    _

</llo_original>
